<compile_context>
chip_gen: v5e
topology: v5e:2x2
jax: 0.10.0
libtpu: 0.0.40
codegen_flags: <defaults>
</compile_context>

<pallas_src>
import functools

import jax
import jax.numpy as jnp
from jax.experimental import pallas as pl
from jax.experimental.pallas import tpu as pltpu


# ----------------------------------------------------------------------------
# Kernel
# ----------------------------------------------------------------------------
def _se_kernel(x_ref, w1_ref, b1_ref, w2_ref, b2_ref, o_ref, *, inv_hw):
    # x_ref: (TB, C, HW) block in native layout.
    x = x_ref[...]

    # squeeze: global average pool over the spatial (lane) axis, f32 accumulate.
    # NOTE: if v7x profiling ever shows the XLU reduce binding, this can be
    # swapped for an MXU matmul against a ones-vector; the MXU is idle here.
    y = jnp.sum(x, axis=2, dtype=jnp.float32) * inv_hw                 # (TB, C)

    # excitation: fc1 -> relu -> fc2 -> sigmoid (f32 throughout; tiny matmuls).
    h = jnp.dot(y, w1_ref[...], preferred_element_type=jnp.float32) + b1_ref[...]
    h = jnp.maximum(h, 0.0)                                            # (TB, Cr)
    s = jnp.dot(h, w2_ref[...], preferred_element_type=jnp.float32) + b2_ref[...]
    s = jax.nn.sigmoid(s)                                              # (TB, C)

    # scale: broadcast the per-channel gate along lanes; multiply in the native
    # dtype so a bf16 input never materializes a full f32 slab.
    s = s.astype(x.dtype)
    o_ref[...] = (x * s[:, :, None]).astype(o_ref.dtype)


# ----------------------------------------------------------------------------
# Sizing helpers
# ----------------------------------------------------------------------------
def _vmem_capacity_bytes():
    try:
        return int(pltpu.get_tpu_info().vmem_capacity_bytes)
    except Exception:
        return 64 << 20  # conservative fallback (v7x per-TensorCore size)


def _padded_vmem_bytes(shape, dtype):
    """Approximate VMEM footprint of a tile padded to (8, 128) on the last 2 dims."""
    if len(shape) >= 2:
        lead = 1
        for d in shape[:-2]:
            lead *= int(d)
        sub = pl.cdiv(int(shape[-2]), 8) * 8
        lane = pl.cdiv(int(shape[-1]), 128) * 128
        n = lead * sub * lane
    else:
        n = pl.cdiv(int(shape[0]) if shape else 1, 128) * 128
    return n * jnp.dtype(dtype).itemsize


def _choose_block_batch(batch, per_elem_bytes, max_block_bytes, min_steps=4):
    """Largest batch tile that fits the block budget, shrunk (when the batch is
    large enough) so the grid keeps >= min_steps steps for pipelining
    (>= 2 steps per TensorCore on v7x megacore)."""
    tb = max(1, min(batch, int(max_block_bytes // max(per_elem_bytes, 1))))
    if batch >= min_steps:
        tb = min(tb, max(1, batch // min_steps))
    elif batch >= 2:
        tb = min(tb, max(1, batch // 2))
    return tb


# ----------------------------------------------------------------------------
# Wrapper
# ----------------------------------------------------------------------------
def se_block(x, w1, b1, w2, b2):
    """x: (B, C, H, W).  w1: (C, Cr), b1: (Cr,), w2: (Cr, C), b2: (C,).

    Weights are the PyTorch nn.Linear weights pre-transposed to (in, out).
    """
    B, C, H, W = x.shape
    Cr = w1.shape[1]
    HW = H * W
    itemsize = jnp.dtype(x.dtype).itemsize

    # Native layout: (B, C, HW) - a free reshape, no HBM transpose.
    x_k = x.reshape(B, C, HW)

    # ---- generation-aware VMEM budget & block-batch selection ---------------
    vmem_cap = _vmem_capacity_bytes()
    headroom = 2 << 20
    budget = min(int(0.55 * vmem_cap), 48 << 20)

    weight_vmem_bytes = (
        _padded_vmem_bytes((C, Cr), w1.dtype)
        + _padded_vmem_bytes((1, Cr), b1.dtype)
        + _padded_vmem_bytes((Cr, C), w2.dtype)
        + _padded_vmem_bytes((1, C), b2.dtype)
    )
    per_elem_bytes = _padded_vmem_bytes((1, C, HW), x.dtype)

    # One batch element's (C, HW) slab must fit with double-buffered in+out.
    if 4 * per_elem_bytes + 2 * weight_vmem_bytes + headroom > int(0.9 * vmem_cap):
        # TODO(synk): add an HW-tiled two-pass (pool pass + scale pass) fallback
        # for feature maps whose single-batch slab exceeds per-core VMEM.
        raise ValueError(
            f"SEBlock slab (C={C}, HW={HW}) does not fit per-core VMEM "
            f"({vmem_cap} bytes) with double buffering."
        )

    max_block_bytes = min((budget - 2 * weight_vmem_bytes - headroom) // 4, 16 << 20)
    max_block_bytes = max(max_block_bytes, per_elem_bytes)
    tb = _choose_block_batch(B, per_elem_bytes, max_block_bytes, min_steps=4)
    grid = (pl.cdiv(B, tb),)
    block_bytes = tb * per_elem_bytes

    vmem_need = 4 * block_bytes + 2 * weight_vmem_bytes + headroom
    vmem_limit = int(min(max(vmem_need, 32 << 20), int(0.95 * vmem_cap)))

    # ---- cost estimate: large, memory-bound custom call ----------------------
    weight_hbm_bytes = sum(
        int(a.size) * jnp.dtype(a.dtype).itemsize for a in (w1, b1, w2, b2)
    )
    cost = pl.CostEstimate(
        flops=int(4 * B * C * Cr + B * C * HW),
        transcendentals=int(B * C),
        bytes_accessed=int(2 * B * C * HW * itemsize + weight_hbm_bytes),
    )

    kernel = functools.partial(_se_kernel, inv_hw=1.0 / HW)

    out_k = pl.pallas_call(
        kernel,
        out_shape=jax.ShapeDtypeStruct((B, C, HW), x.dtype),
        grid=grid,
        in_specs=[
            pl.BlockSpec((tb, C, HW), lambda b: (b, 0, 0)),   # x block (native layout)
            pl.BlockSpec((C, Cr), lambda b: (0, 0)),          # fc1 weight (in, out)
            pl.BlockSpec((1, Cr), lambda b: (0, 0)),          # fc1 bias
            pl.BlockSpec((Cr, C), lambda b: (0, 0)),          # fc2 weight (in, out)
            pl.BlockSpec((1, C), lambda b: (0, 0)),           # fc2 bias
        ],
        out_specs=pl.BlockSpec((tb, C, HW), lambda b: (b, 0, 0)),
        compiler_params=pltpu.CompilerParams(
            dimension_semantics=("parallel",),
            vmem_limit_bytes=vmem_limit,
        ),
        cost_estimate=cost,
    )(x_k, w1, b1.reshape(1, Cr), w2, b2.reshape(1, C))

    return out_k.reshape(B, C, H, W)


# ----------------------------------------------------------------------------
# Reference & test
# ----------------------------------------------------------------------------
def _init_linear(key, in_features, out_features):
    # Mimic nn.Linear default init: U(-1/sqrt(fan_in), 1/sqrt(fan_in)).
    kw, kb = jax.random.split(key)
    bound = 1.0 / (in_features ** 0.5)
    # PyTorch stores weight as (out, in); return it transposed to (in, out).
    w = jax.random.uniform(kw, (out_features, in_features), jnp.float32, -bound, bound)
    b = jax.random.uniform(kb, (out_features,), jnp.float32, -bound, bound)
    return w.T, b


def _reference(x, w1, b1, w2, b2):
    # Pure-JAX reference matching the PyTorch forward.
    y = jnp.mean(x, axis=(2, 3))                            # (B, C)
    y = jnp.maximum(y @ w1 + b1, 0.0)
    y = jax.nn.sigmoid(y @ w2 + b2)
    return x * y[:, :, None, None]


if __name__ == "__main__":
    key = jax.random.PRNGKey(0)
    k_x, k_fc1, k_fc2 = jax.random.split(key, 3)

    # Small shapes consistent with the module: channels divisible by
    # reduction=16 so the hidden dim is nonzero.
    B, C, H, W = 2, 32, 16, 16
    reduction = 16
    Cr = C // reduction

    x = jax.random.normal(k_x, (B, C, H, W), jnp.float32)
    w1, b1 = _init_linear(k_fc1, C, Cr)     # fc1: C -> C//r
    w2, b2 = _init_linear(k_fc2, Cr, C)     # fc2: C//r -> C

    out = se_block(x, w1, b1, w2, b2)
    out = jax.block_until_ready(out)

    ref = _reference(x, w1, b1, w2, b2)
    assert out.shape == (B, C, H, W)
    assert jnp.allclose(out, ref, atol=2e-5, rtol=1e-5), (
        float(jnp.max(jnp.abs(out - ref)))
    )

    print("KERNEL_OK")
</pallas_src>

<mosaic_0001>
module attributes {stable_mosaic.version = 11 : i64} {
  func.func @_se_kernel(%arg0: i32, %arg1: memref<1x32x256xf32, #tpu.memory_space<vmem>>, %arg2: memref<32x2xf32, #tpu.memory_space<vmem>>, %arg3: memref<1x2xf32, #tpu.memory_space<vmem>>, %arg4: memref<2x32xf32, #tpu.memory_space<vmem>>, %arg5: memref<1x32xf32, #tpu.memory_space<vmem>>, %arg6: memref<1x32x256xf32, #tpu.memory_space<vmem>>) attributes {dimension_semantics = [#tpu.dimension_semantics<parallel>], iteration_bounds = array<i64: 2>, scalar_prefetch = 0 : i64, scratch_operands = 0 : i64, tpu.core_type = #tpu.core_type<tc>, window_params = [{transform_indices = @transform_0, window_bounds = array<i64: 1, 32, 256>}, {pipeline_mode = #tpu.pipeline_mode<synchronous>, transform_indices = @transform_1, window_bounds = array<i64: 32, 2>}, {pipeline_mode = #tpu.pipeline_mode<synchronous>, transform_indices = @transform_2, window_bounds = array<i64: 1, 2>}, {pipeline_mode = #tpu.pipeline_mode<synchronous>, transform_indices = @transform_3, window_bounds = array<i64: 2, 32>}, {pipeline_mode = #tpu.pipeline_mode<synchronous>, transform_indices = @transform_4, window_bounds = array<i64: 1, 32>}, {transform_indices = @transform_5, window_bounds = array<i64: 1, 32, 256>}]} {
    %c0 = arith.constant 0 : index
    %c0_0 = arith.constant 0 : index
    %c0_1 = arith.constant 0 : index
    %0 = vector.load %arg1[%c0, %c0_0, %c0_1] : memref<1x32x256xf32, #tpu.memory_space<vmem>>, vector<1x32x256xf32>
    %cst = arith.constant dense<0.000000e+00> : vector<1x32xf32>
    %1 = vector.multi_reduction <add>, %0, %cst [2] : vector<1x32x256xf32> to vector<1x32xf32>
    %cst_2 = arith.constant 3.906250e-03 : f32
    %2 = vector.broadcast %cst_2 : f32 to vector<1x32xf32>
    %3 = arith.mulf %1, %2 : vector<1x32xf32>
    %c0_3 = arith.constant 0 : index
    %c0_4 = arith.constant 0 : index
    %4 = vector.load %arg2[%c0_3, %c0_4] : memref<32x2xf32, #tpu.memory_space<vmem>>, vector<32x2xf32>
    %cst_5 = arith.constant dense<0.000000e+00> : vector<1x2xf32>
    %5 = tpu.matmul %3, %4, %cst_5 {dimension_numbers = #tpu.dot_dimension_numbers<[1], [0], [0], [1], [0, 0, 1, 1], [], []>} : vector<1x32xf32>, vector<32x2xf32>, vector<1x2xf32> -> vector<1x2xf32>
    %c0_6 = arith.constant 0 : index
    %c0_7 = arith.constant 0 : index
    %6 = vector.load %arg3[%c0_6, %c0_7] : memref<1x2xf32, #tpu.memory_space<vmem>>, vector<1x2xf32>
    %7 = arith.addf %5, %6 : vector<1x2xf32>
    %cst_8 = arith.constant 0.000000e+00 : f32
    %8 = vector.broadcast %cst_8 : f32 to vector<1x2xf32>
    %9 = arith.maximumf %7, %8 : vector<1x2xf32>
    %c0_9 = arith.constant 0 : index
    %c0_10 = arith.constant 0 : index
    %10 = vector.load %arg4[%c0_9, %c0_10] : memref<2x32xf32, #tpu.memory_space<vmem>>, vector<2x32xf32>
    %cst_11 = arith.constant dense<0.000000e+00> : vector<1x32xf32>
    %11 = tpu.matmul %9, %10, %cst_11 {dimension_numbers = #tpu.dot_dimension_numbers<[1], [0], [0], [1], [0, 0, 1, 1], [], []>} : vector<1x2xf32>, vector<2x32xf32>, vector<1x32xf32> -> vector<1x32xf32>
    %c0_12 = arith.constant 0 : index
    %c0_13 = arith.constant 0 : index
    %12 = vector.load %arg5[%c0_12, %c0_13] : memref<1x32xf32, #tpu.memory_space<vmem>>, vector<1x32xf32>
    %13 = arith.addf %11, %12 : vector<1x32xf32>
    %14 = arith.negf %13 : vector<1x32xf32>
    %15 = math.exp %14 : vector<1x32xf32>
    %cst_14 = arith.constant 1.000000e+00 : f32
    %16 = vector.broadcast %cst_14 : f32 to vector<1x32xf32>
    %17 = arith.addf %16, %15 : vector<1x32xf32>
    %18 = arith.divf %16, %17 : vector<1x32xf32>
    %19 = vector.shape_cast %18 : vector<1x32xf32> to vector<1x32x1xf32>
    %20 = vector.broadcast %19 : vector<1x32x1xf32> to vector<1x32x256xf32>
    %21 = arith.mulf %0, %20 : vector<1x32x256xf32>
    %c0_15 = arith.constant 0 : index
    %c0_16 = arith.constant 0 : index
    %c0_17 = arith.constant 0 : index
    %22 = vector.load %arg6[%c0_15, %c0_16, %c0_17] : memref<1x32x256xf32, #tpu.memory_space<vmem>>, vector<1x32x256xf32>
    tpu.vector_store %arg6[%c0_15, %c0_16, %c0_17], %21 {strides = array<i32>} : memref<1x32x256xf32, #tpu.memory_space<vmem>>, vector<1x32x256xf32>,
    return
  }
  func.func @transform_0(%arg0: i32) -> (i32, i32, i32) {
    %c0_i32 = arith.constant 0 : i32
    %c0_i32_0 = arith.constant 0 : i32
    %c0_i32_1 = arith.constant 0 : i32
    return %arg0, %c0_i32, %c0_i32_0 : i32, i32, i32
  }
  func.func @transform_1(%arg0: i32) -> (i32, i32) {
    %c0_i32 = arith.constant 0 : i32
    %c0_i32_0 = arith.constant 0 : i32
    %c0_i32_1 = arith.constant 0 : i32
    return %c0_i32, %c0_i32_0 : i32, i32
  }
  func.func @transform_2(%arg0: i32) -> (i32, i32) {
    %c0_i32 = arith.constant 0 : i32
    %c0_i32_0 = arith.constant 0 : i32
    %c0_i32_1 = arith.constant 0 : i32
    return %c0_i32, %c0_i32_0 : i32, i32
  }
  func.func @transform_3(%arg0: i32) -> (i32, i32) {
    %c0_i32 = arith.constant 0 : i32
    %c0_i32_0 = arith.constant 0 : i32
    %c0_i32_1 = arith.constant 0 : i32
    return %c0_i32, %c0_i32_0 : i32, i32
  }
  func.func @transform_4(%arg0: i32) -> (i32, i32) {
    %c0_i32 = arith.constant 0 : i32
    %c0_i32_0 = arith.constant 0 : i32
    %c0_i32_1 = arith.constant 0 : i32
    return %c0_i32, %c0_i32_0 : i32, i32
  }
  func.func @transform_5(%arg0: i32) -> (i32, i32, i32) {
    %c0_i32 = arith.constant 0 : i32
    %c0_i32_0 = arith.constant 0 : i32
    %c0_i32_1 = arith.constant 0 : i32
    return %arg0, %c0_i32, %c0_i32_0 : i32, i32, i32
  }
}

</mosaic_0001>

<llo_original>
// kernel: tpu_custom_call.1
$region0: #{tpu_custom_call.1}
  #allocation0 [shape = 'u32[]', space=smem, size = 0x4, offset = 0x4, fixed_abs, tag = 'smem constant byte address 0x4 - core index']
  #allocation1 [shape = 'u32[72,128]{1,0:T(1,128)}', space=vmem, size = 0x9000, scoped, tag = 'internal scratch']
  %s0 = inlined_call_operand.hbm [shape: f32[2,32,256], index: 0, kind: input, shape index: {}]
  %s1 = inlined_call_operand.vmem [shape: f32[32,2], index: 1, kind: input, shape index: {}]
  %s2 = inlined_call_operand.vmem [shape: f32[1,2], index: 2, kind: input, shape index: {}]
  %s3 = inlined_call_operand.vmem [shape: f32[2,32], index: 3, kind: input, shape index: {}]
  %s4 = inlined_call_operand.vmem [shape: f32[1,32], index: 4, kind: input, shape index: {}]
  %s5 = inlined_call_operand.hbm [shape: f32[2,32,256], index: 5, kind: output, shape index: {}]
  %s6 = sld [smem:[#allocation0]]
  $region57: #{tpu_custom_call.1} parent=0
    _
  %s8 = ssub.s32 1, %s6
  %s9 = scalar_select 0, %s8, %s6
  $region1: #{tpu_custom_call.1} parent=0
    #allocation2 [shape = 'u8[65536]{0}', space=vmem, size = 0x10000, scoped, tag = 'input window, operand 0']
    #allocation3 [shape = 's32[2]{0}', space=sflag, size = 0x8, scoped, tag = 'scoped memory for tpu_custom_call.1']
    #allocation4 [shape = 's32[2]{0}', space=sflag, size = 0x8, scoped, tag = 'scoped memory for tpu_custom_call.1']
    #allocation5 [shape = 'u8[65536]{0}', space=vmem, size = 0x10000, scoped, tag = 'output window, operand 0']
    %10 = vsyncpa [#allocation3], 0
    %s11 = scalar_lea.sflag [#allocation3], 1
    %12 = vsyncpa %s11, 0
    %13 = vsyncpa [#allocation4], 0
    %s14 = scalar_lea.sflag [#allocation4], 1
    %15 = vsyncpa %s14, 0
    loop: start=0, step=1, limit=4
    $region2: #{tpu_custom_call.1} parent=1 // loop_pre_header
      _
    $region3: #{tpu_custom_call.1} parent=1 // loop_header
      %s17 = sphi 0, %s21
      %p18 = scmp.ge.s32.totalorder %s17, 4
      %s27 = sphi 0, %s29
      %s30 = sphi 0, %s27
      %s31 = sphi 0, %s30
      %s47 = sphi 0, %s31
      %s51 = sphi 0, %s51
      %s53 = sphi 0, %s51
      %s54 = sphi 0, %s53
      %s68 = sphi 0, %s54
      %s72 = sphi 0, %s72
      %s74 = sphi 0, %s72
      %s75 = sphi 0, %s74
      %s89 = sphi 0, %s75
      %s93 = sphi 0, %s93
      %s95 = sphi 0, %s93
      %s96 = sphi 0, %s95
      %s110 = sphi 0, %s96
      %s114 = sphi 0, %s114
      %s116 = sphi 0, %s114
      %s117 = sphi 0, %s116
      %s131 = sphi 0, %s117
      %s137 = sphi 0, %s139
      %s140 = sphi 0, %s137
      %s141 = sphi 0, %s140
      %s157 = sphi 0, %s141
    $region4: #{tpu_custom_call.1} parent=1 // loop_header_branch
      %20 = sbr.rel (%p18) target = $region8
    $region5: #{tpu_custom_call.1} parent=1 // loop_body
      %s22 = ssub.s32 %s17, 1
      %s23 = ssub.s32 %s17, 2
      %s24 = sadd.s32 %s17, 1
      %s25 = ssub.s32 %s17, %s24
      %p26 = scmp.eq.s32.totalorder %s25, 0
      %s28 = sadd.s32 %s27, 1
      %s29 = scalar_select %p26, %s27, %s28
      %p32 = pneg %p26
      %p33 = scmp.eq.s32.totalorder %s17, 1
      %p34 = por %p32, %p33
      %p35 = scmp.ne.s32.totalorder %s27, %s30
      %p36 = scmp.eq.s32.totalorder %s17, 0
      %p37 = por %p35, %p36
      %p38 = scmp.ne.s32.totalorder %s27, %s30
      %p39 = scmp.eq.s32.totalorder %s22, 1
      %p40 = por %p38, %p39
      %p41 = scmp.ne.s32.totalorder %s30, %s31
      %p42 = scmp.eq.s32.totalorder %s22, 0
      %p43 = por %p41, %p42
      %p44 = scmp.ne.s32.totalorder %s30, %s31
      %p45 = scmp.eq.s32.totalorder %s23, 1
      %p46 = por %p44, %p45
      %p48 = scmp.ne.s32.totalorder %s31, %s47
      %p49 = scmp.eq.s32.totalorder %s23, 0
      %p50 = por %p48, %p49
      %s52 = sadd.s32 %s51, 1
      %p55 = scmp.eq.s32.totalorder %s17, 1
      %p56 = scmp.ne.s32.totalorder %s51, %s53
      %p57 = scmp.eq.s32.totalorder %s17, 0
      %p58 = por %p56, %p57
      %p59 = scmp.ne.s32.totalorder %s51, %s53
      %p60 = scmp.eq.s32.totalorder %s22, 1
      %p61 = por %p59, %p60
      %p62 = scmp.ne.s32.totalorder %s53, %s54
      %p63 = scmp.eq.s32.totalorder %s22, 0
      %p64 = por %p62, %p63
      %p65 = scmp.ne.s32.totalorder %s53, %s54
      %p66 = scmp.eq.s32.totalorder %s23, 1
      %p67 = por %p65, %p66
      %p69 = scmp.ne.s32.totalorder %s54, %s68
      %p70 = scmp.eq.s32.totalorder %s23, 0
      %p71 = por %p69, %p70
      %s73 = sadd.s32 %s72, 1
      %p76 = scmp.eq.s32.totalorder %s17, 1
      %p77 = scmp.ne.s32.totalorder %s72, %s74
      %p78 = scmp.eq.s32.totalorder %s17, 0
      %p79 = por %p77, %p78
      %p80 = scmp.ne.s32.totalorder %s72, %s74
      %p81 = scmp.eq.s32.totalorder %s22, 1
      %p82 = por %p80, %p81
      %p83 = scmp.ne.s32.totalorder %s74, %s75
      %p84 = scmp.eq.s32.totalorder %s22, 0
      %p85 = por %p83, %p84
      %p86 = scmp.ne.s32.totalorder %s74, %s75
      %p87 = scmp.eq.s32.totalorder %s23, 1
      %p88 = por %p86, %p87
      %p90 = scmp.ne.s32.totalorder %s75, %s89
      %p91 = scmp.eq.s32.totalorder %s23, 0
      %p92 = por %p90, %p91
      %s94 = sadd.s32 %s93, 1
      %p97 = scmp.eq.s32.totalorder %s17, 1
      %p98 = scmp.ne.s32.totalorder %s93, %s95
      %p99 = scmp.eq.s32.totalorder %s17, 0
      %p100 = por %p98, %p99
      %p101 = scmp.ne.s32.totalorder %s93, %s95
      %p102 = scmp.eq.s32.totalorder %s22, 1
      %p103 = por %p101, %p102
      %p104 = scmp.ne.s32.totalorder %s95, %s96
      %p105 = scmp.eq.s32.totalorder %s22, 0
      %p106 = por %p104, %p105
      %p107 = scmp.ne.s32.totalorder %s95, %s96
      %p108 = scmp.eq.s32.totalorder %s23, 1
      %p109 = por %p107, %p108
      %p111 = scmp.ne.s32.totalorder %s96, %s110
      %p112 = scmp.eq.s32.totalorder %s23, 0
      %p113 = por %p111, %p112
      %s115 = sadd.s32 %s114, 1
      %p118 = scmp.eq.s32.totalorder %s17, 1
      %p119 = scmp.ne.s32.totalorder %s114, %s116
      %p120 = scmp.eq.s32.totalorder %s17, 0
      %p121 = por %p119, %p120
      %p122 = scmp.ne.s32.totalorder %s114, %s116
      %p123 = scmp.eq.s32.totalorder %s22, 1
      %p124 = por %p122, %p123
      %p125 = scmp.ne.s32.totalorder %s116, %s117
      %p126 = scmp.eq.s32.totalorder %s22, 0
      %p127 = por %p125, %p126
      %p128 = scmp.ne.s32.totalorder %s116, %s117
      %p129 = scmp.eq.s32.totalorder %s23, 1
      %p130 = por %p128, %p129
      %p132 = scmp.ne.s32.totalorder %s117, %s131
      %p133 = scmp.eq.s32.totalorder %s23, 0
      %p134 = por %p132, %p133
      %s135 = ssub.s32 %s17, %s24
      %p136 = scmp.eq.s32.totalorder %s135, 0
      %s138 = sadd.s32 %s137, 1
      %s139 = scalar_select %p136, %s137, %s138
      %p142 = pneg %p136
      %p143 = scmp.eq.s32.totalorder %s17, 1
      %p144 = por %p142, %p143
      %p145 = scmp.ne.s32.totalorder %s137, %s140
      %p146 = scmp.eq.s32.totalorder %s17, 0
      %p147 = por %p145, %p146
      %p148 = scmp.ne.s32.totalorder %s137, %s140
      %p149 = scmp.eq.s32.totalorder %s22, 1
      %p150 = por %p148, %p149
      %p151 = scmp.ne.s32.totalorder %s140, %s141
      %p152 = scmp.eq.s32.totalorder %s22, 0
      %p153 = por %p151, %p152
      %p154 = scmp.ne.s32.totalorder %s140, %s141
      %p155 = scmp.eq.s32.totalorder %s23, 1
      %p156 = por %p154, %p155
      %p158 = scmp.ne.s32.totalorder %s141, %s157
      %p159 = scmp.eq.s32.totalorder %s23, 0
      %p160 = por %p158, %p159
      %p161 = scmp.le.s32.totalorder 1, %s17
      %p162 = scmp.lt.s32.totalorder %s17, 3
      %p163 = pnand %p161, %p162
      %p164 = pneg %p163
      // Predicated region
      $region9: #{tpu_custom_call.1} parent=5 // pred_check
        _
      $region10: #{tpu_custom_call.1} parent=5 // pred_check_branch
        %166 = sbr.rel (%p163) target = $region12
      $region11: #{tpu_custom_call.1} parent=5 // pred_region
        %s167 = ssub.s32 %s17, 1
        // Predicated region
        $region13: #{tpu_custom_call.1} parent=11 // pred_check
          %p168 = pneg %p64
        $region14: #{tpu_custom_call.1} parent=11 // pred_check_branch
          %170 = sbr.rel (%p168) target = $region16
        $region15: #{tpu_custom_call.1} parent=11 // pred_region
          _
        $region16: #{tpu_custom_call.1} parent=11 // pred_fallthru
          _
        // Predicated region
        $region17: #{tpu_custom_call.1} parent=11 // pred_check
          %p171 = pneg %p85
        $region18: #{tpu_custom_call.1} parent=11 // pred_check_branch
          %173 = sbr.rel (%p171) target = $region20
        $region19: #{tpu_custom_call.1} parent=11 // pred_region
          _
        $region20: #{tpu_custom_call.1} parent=11 // pred_fallthru
          _
        // Predicated region
        $region21: #{tpu_custom_call.1} parent=11 // pred_check
          %p174 = pneg %p106
        $region22: #{tpu_custom_call.1} parent=11 // pred_check_branch
          %176 = sbr.rel (%p174) target = $region24
        $region23: #{tpu_custom_call.1} parent=11 // pred_region
          _
        $region24: #{tpu_custom_call.1} parent=11 // pred_fallthru
          _
        // Predicated region
        $region25: #{tpu_custom_call.1} parent=11 // pred_check
          %p177 = pneg %p127
        $region26: #{tpu_custom_call.1} parent=11 // pred_check_branch
          %179 = sbr.rel (%p177) target = $region28
        $region27: #{tpu_custom_call.1} parent=11 // pred_region
          _
        $region28: #{tpu_custom_call.1} parent=11 // pred_fallthru
          _
      $region12: #{tpu_custom_call.1} parent=5 // pred_fallthru
        _
      %p180 = scmp.lt.s32.totalorder %s17, 2
      // Predicated region
      $region29: #{tpu_custom_call.1} parent=5 // pred_check
        %p181 = pneg %p180
      $region30: #{tpu_custom_call.1} parent=5 // pred_check_branch
        %183 = sbr.rel (%p181) target = $region32
      $region31: #{tpu_custom_call.1} parent=5 // pred_region
        // Predicated region
        $region33: #{tpu_custom_call.1} parent=31 // pred_check
          %p184 = pneg %p37
        $region34: #{tpu_custom_call.1} parent=31 // pred_check_branch
          %186 = sbr.rel (%p184) target = $region36
        $region35: #{tpu_custom_call.1} parent=31 // pred_region
          %s187 = sand.u32 %s27, 1
          %s188 = scalar_lea.sflag [#allocation3], %s187
          %s189 = sand.u32 %s27, 1
          %s190 = smul.addr %s189, 64
          %s191 = scalar_lea.vmem [#allocation2], %s190
          %193 = vsyncadd %s188, 0
          %s194 = smul.addr %s17, 8
          %s195 = smul.addr %s194, 8
          %s196 = scalar_lea.hbm %s0, %s195
          %s197 = sshll.u32 %s196, 4
          %s198 = int_to_ptr.hbm [resolvable:$true] %s197
          %s199 = sshll.u32 %s191, 4
          %s200 = int_to_ptr.vmem [resolvable:$true] %s199
          %205 = dma.hbm_to_vmem [thread:$0]  %s198, 1024, %s200, %s188, 256, 256, 16
        $region36: #{tpu_custom_call.1} parent=31 // pred_fallthru
          _
      $region32: #{tpu_custom_call.1} parent=5 // pred_fallthru
        _
      %p206 = scmp.le.s32.totalorder 1, %s17
      %p207 = scmp.lt.s32.totalorder %s17, 3
      %p208 = pnand %p206, %p207
      %p209 = pneg %p208
      // Predicated region
      $region37: #{tpu_custom_call.1} parent=5 // pred_check
        _
      $region38: #{tpu_custom_call.1} parent=5 // pred_check_branch
        %211 = sbr.rel (%p208) target = $region40
      $region39: #{tpu_custom_call.1} parent=5 // pred_region
        %s212 = ssub.s32 %s17, 1
        %s213 = sand.u32 %s30, 1
        %s214 = scalar_lea.sflag [#allocation3], %s213
        %s215 = sand.u32 %s30, 1
        %s216 = smul.addr %s215, 64
        %s217 = scalar_lea.vmem [#allocation2], %s216
        // Predicated region
        $region41: #{tpu_custom_call.1} parent=39 // pred_check
          %p218 = pneg %p43
        $region42: #{tpu_custom_call.1} parent=39 // pred_check_branch
          %220 = sbr.rel (%p218) target = $region44
        $region43: #{tpu_custom_call.1} parent=39 // pred_region
          %222 = dma.done %s214, 1024
        $region44: #{tpu_custom_call.1} parent=39 // pred_fallthru
          _
        %s223 = sand.u32 %s30, 1
        %s224 = scalar_lea.sflag [#allocation3], %s223
        %s225 = sand.u32 %s30, 1
        %s226 = smul.addr %s225, 64
        %s227 = scalar_lea.vmem [#allocation2], %s226
        %p228 = pneg %p43
        %p229 = pneg %p40
        %p230 = pneg %p64
        %p231 = pneg %p61
        %p232 = pneg %p85
        %p233 = pneg %p82
        %p234 = pneg %p106
        %p235 = pneg %p103
        %p236 = pneg %p127
        %p237 = pneg %p124
        %p238 = pneg %p153
        %p239 = pneg %p150
        %s240 = sand.u32 %s140, 1
        %s241 = scalar_lea.sflag [#allocation4], %s240
        %s242 = sand.u32 %s140, 1
        %s243 = smul.addr %s242, 64
        %s244 = scalar_lea.vmem [#allocation5], %s243
        %v245 = vld [vmem:[%s217] sm:$0xff]
        %v246 = vld [vmem:[%s217 + $0x8] sm:$0xff]
        %v247 = vld [vmem:[%s217 + $0x10] sm:$0xff]
        %v248 = vld [vmem:[%s217 + $0x18] sm:$0xff]
        %v249 = vld [vmem:[%s217 + $0x20] sm:$0xff]
        %v250 = vld [vmem:[%s217 + $0x28] sm:$0xff]
        %v251 = vld [vmem:[%s217 + $0x30] sm:$0xff]
        %v252 = vld [vmem:[%s217 + $0x38] sm:$0xff]
        %v253 = vadd.f32 %v245, %v246
        %254 = vadd.xlane.f32.xlu0 %v253
        %v255 = vpop.xlane.xlu0 %254
        %v256 = vadd.f32 %v247, %v248
        %257 = vadd.xlane.f32.xlu0 %v256
        %v258 = vpop.xlane.xlu0 %257
        %v259 = vadd.f32 %v249, %v250
        %260 = vadd.xlane.f32.xlu0 %v259
        %v261 = vpop.xlane.xlu0 %260
        %v262 = vadd.f32 %v251, %v252
        %263 = vadd.xlane.f32.xlu0 %v262
        %v264 = vpop.xlane.xlu0 %263
        %v265 = vmul.f32 %v255, 0.00390625
        %v266 = vmul.f32 %v258, 0.00390625
        %v267 = vmul.f32 %v261, 0.00390625
        %v268 = vmul.f32 %v264, 0.00390625
        %v269 = vld [vmem:[%s1] sm:$0xff]
        %v270 = vld [vmem:[%s1 + $0x8] sm:$0xff]
        %v271 = vld [vmem:[%s1 + $0x10] sm:$0xff]
        %v272 = vld [vmem:[%s1 + $0x18] sm:$0xff]
        %v273 = vld [vmem:[%s2] sm:$0x1]
        %v278 = vlaneseq
        %v279 = vand.u32 %v278, 127
        %v280 = vperm.slane %v265, %v279
        %v281 = vadd.s32 %v279, 4294967288
        %v282 = vperm.slane %v266, %v281
        %vm283 = vcmask 130112
        %v284 = vsel %vm283, %v282, %v280
        %v285 = vadd.s32 %v279, 4294967280
        %v286 = vperm.slane %v267, %v285
        %vm287 = vcmask 195712
        %v288 = vsel %vm287, %v286, %v284
        %v289 = vadd.s32 %v279, 4294967272
        %v290 = vperm.slane %v268, %v289
        %vm291 = vcmask 261312
        %v292 = vsel %vm291, %v290, %v288
        %vm293 = vcmask 261120
        %v294 = vsel %vm293, %v292, 0
        %296 = vmatpush.msra.mxu0 0.0
        %297 = vmatpush.msra.mxu0 0.0
        %298 = vmatpush.msra.mxu0 0.0
        %299 = vmatpush.msra.mxu0 0.0
        %300 = vmatpush.msra.mxu0 0.0
        %301 = vmatpush.msra.mxu0 0.0
        %302 = vmatpush.msra.mxu0 0.0
        %303 = vmatpush.msra.mxu0 0.0
        %304 = vmatpush.msra.mxu0 0.0
        %305 = vmatpush.msra.mxu0 0.0
        %306 = vmatpush.msra.mxu0 0.0
        %307 = vmatpush.msra.mxu0 0.0
        %308 = vmatpush.msra.mxu0 %v272
        %309 = vmatpush.msra.mxu0 %v271
        %310 = vmatpush.msra.mxu0 %v270
        %311 = vmatpush.msra.mxu0 %v269
        %312 = vmatmul.f32.gmra.mxu0 %v294
        %v313 = vpop.f32.mrf.mxu0
        %v314 = vadd.f32 %v273, %v313
        %315 = vdwg.mxu0
        %v316 = vmax.f32 %v314, 0.0
        %v317 = vld [vmem:[%s3] sm:$0x3]
        %v318 = vld [vmem:[%s4] sm:$0x1]
        %vm319 = vcmask 15360
        %v321 = vsel %vm319, %v316, 0
        %vm323 = vcmask 1041408
        %v325 = vsel %vm323, %v317, 0
        %327 = vmatpush.msra.mxu0 0.0
        %328 = vmatpush.msra.mxu0 0.0
        %329 = vmatpush.msra.mxu0 0.0
        %330 = vmatpush.msra.mxu0 0.0
        %331 = vmatpush.msra.mxu0 0.0
        %332 = vmatpush.msra.mxu0 0.0
        %333 = vmatpush.msra.mxu0 0.0
        %334 = vmatpush.msra.mxu0 0.0
        %335 = vmatpush.msra.mxu0 0.0
        %336 = vmatpush.msra.mxu0 0.0
        %337 = vmatpush.msra.mxu0 0.0
        %338 = vmatpush.msra.mxu0 0.0
        %339 = vmatpush.msra.mxu0 0.0
        %340 = vmatpush.msra.mxu0 0.0
        %341 = vmatpush.msra.mxu0 0.0
        %342 = vmatpush.msra.mxu0 %v325
        %343 = vmatmul.f32.gmra.mxu0 %v321
        %v344 = vpop.f32.mrf.mxu0
        %v345 = vadd.f32 %v318, %v344
        %346 = vdwg.mxu0
        %v347 = vxor.u32 %v345, 2147483648
        %v348 = vmul.f32 %v347, 1.442695
        %v349 = vpow.pop %v348
        %v350 = vadd.f32 %v349, 1.0
        %v351 = vrcp.pop %v350
        %v352 = vmul.f32 %v350, %v351
        %v353 = vsub.f32 1.0, %v352
        %v354 = vmul.f32 %v351, %v353
        %v355 = vadd.f32 %v351, %v354
        %vm356 = vweird.f32 %v350
        %vm357 = vweird.f32 %v351
        %vm358 = vmor %vm356, %vm357
        %v359 = vsel %vm358, %v351, %v355
        %v360 = vand.u32 2147483647, %v350
        %vm361 = vcmp.eq.f32.partialorder %v360, 8.507059e+37
        %v362 = vand.u32 %v350, 2147483648
        %v363 = vor.u32 1.1754944e-38, %v362
        %v364 = vsel %vm361, %v363, %v359
        %v365 = vmul.f32 1.0, %v364
        %v366 = vperm.slane %v365, 0
        %v367 = vlaneseq
        %v368 = vshrl.u32 %v367, 7
        %370 = vset.pattern.permute.xlu0 %v368
        %371 = vperm.xlu0 %370, %v366
        %v372 = vpop.permute.xlu0 %371
        %v373 = vlaneseq
        %v374 = vshrl.u32 %v373, 7
        %v375 = vadd.s32 %v374, 8
        %376 = vset.pattern.permute.xlu0 %v375
        %377 = vperm.xlu0 %376, %v366
        %v378 = vpop.permute.xlu0 %377
        %v379 = vlaneseq
        %v380 = vshrl.u32 %v379, 7
        %v381 = vadd.s32 %v380, 16
        %382 = vset.pattern.permute.xlu0 %v381
        %383 = vperm.xlu0 %382, %v366
        %v384 = vpop.permute.xlu0 %383
        %v385 = vlaneseq
        %v386 = vshrl.u32 %v385, 7
        %v387 = vadd.s32 %v386, 24
        %388 = vset.pattern.permute.xlu0 %v387
        %389 = vperm.xlu0 %388, %v366
        %v390 = vpop.permute.xlu0 %389
        %v391 = vmul.f32 %v245, %v372
        %v392 = vmul.f32 %v246, %v372
        %v393 = vmul.f32 %v247, %v378
        %v394 = vmul.f32 %v248, %v378
        %v395 = vmul.f32 %v249, %v384
        %v396 = vmul.f32 %v250, %v384
        %v397 = vmul.f32 %v251, %v390
        %v398 = vmul.f32 %v252, %v390
        %399 = vst [vmem:[%s244] sm:$0xff] %v391
        %400 = vst [vmem:[%s244 + $0x8] sm:$0xff] %v392
        %401 = vst [vmem:[%s244 + $0x10] sm:$0xff] %v393
        %402 = vst [vmem:[%s244 + $0x18] sm:$0xff] %v394
        %403 = vst [vmem:[%s244 + $0x20] sm:$0xff] %v395
        %404 = vst [vmem:[%s244 + $0x28] sm:$0xff] %v396
        %405 = vst [vmem:[%s244 + $0x30] sm:$0xff] %v397
        %406 = vst [vmem:[%s244 + $0x38] sm:$0xff] %v398
        %s407 = sand.u32 %s140, 1
        %s408 = scalar_lea.sflag [#allocation4], %s407
        %s409 = sand.u32 %s140, 1
        %s410 = smul.addr %s409, 64
        %s411 = scalar_lea.vmem [#allocation5], %s410
        // Predicated region
        $region45: #{tpu_custom_call.1} parent=39 // pred_check
          %p412 = pneg %p150
        $region46: #{tpu_custom_call.1} parent=39 // pred_check_branch
          %414 = sbr.rel (%p412) target = $region48
        $region47: #{tpu_custom_call.1} parent=39 // pred_region
          %416 = vsyncadd %s408, 0
          %s417 = smul.addr %s22, 8
          %s418 = smul.addr %s417, 8
          %s419 = scalar_lea.hbm %s5, %s418
          %s420 = sshll.u32 %s411, 4
          %s421 = int_to_ptr.vmem [resolvable:$true] %s420
          %s422 = sshll.u32 %s419, 4
          %s423 = int_to_ptr.hbm [resolvable:$true] %s422
          %428 = dma.vmem_to_hbm [thread:$0]  %s421, 1024, %s423, %s408, 256, 256, 16
        $region48: #{tpu_custom_call.1} parent=39 // pred_fallthru
          _
      $region40: #{tpu_custom_call.1} parent=5 // pred_fallthru
        _
      %p429 = scmp.le.s32.totalorder 2, %s17
      // Predicated region
      $region49: #{tpu_custom_call.1} parent=5 // pred_check
        %p430 = pneg %p429
      $region50: #{tpu_custom_call.1} parent=5 // pred_check_branch
        %432 = sbr.rel (%p430) target = $region52
      $region51: #{tpu_custom_call.1} parent=5 // pred_region
        %s433 = ssub.s32 %s17, 2
        // Predicated region
        $region53: #{tpu_custom_call.1} parent=51 // pred_check
          %p434 = pneg %p156
        $region54: #{tpu_custom_call.1} parent=51 // pred_check_branch
          %436 = sbr.rel (%p434) target = $region56
        $region55: #{tpu_custom_call.1} parent=51 // pred_region
          %s437 = sand.u32 %s141, 1
          %s438 = scalar_lea.sflag [#allocation4], %s437
          %s439 = sand.u32 %s141, 1
          %s440 = smul.addr %s439, 64
          %s441 = scalar_lea.vmem [#allocation5], %s440
          %443 = dma.done %s438, 1024
        $region56: #{tpu_custom_call.1} parent=51 // pred_fallthru
          _
      $region52: #{tpu_custom_call.1} parent=5 // pred_fallthru
        _
    $region6: #{tpu_custom_call.1} parent=1 // loop_footer
      %s21 = sadd.s32 1, %s17
    $region7: #{tpu_custom_call.1} parent=1 // loop_footer_branch
      %16 = sbr.rel target = $region3
    $region8: #{tpu_custom_call.1} parent=1 // loop_exit
      _
    %444 = vsyncpa [#allocation3], 1
    %s445 = scalar_lea.sflag [#allocation3], 1
    %446 = vsyncpa %s445, 1
    %447 = vsyncpa [#allocation4], 1
    %s448 = scalar_lea.sflag [#allocation4], 1
    %449 = vsyncpa %s448, 1

</llo_original>
